<compile_context>
chip_gen: v5e
topology: v5e:2x2
jax: 0.10.0
libtpu: 0.0.40
codegen_flags: <defaults>
</compile_context>

<pallas_src>
import functools

import jax
import jax.numpy as jnp
from jax.experimental import pallas as pl
from jax.experimental.pallas import tpu as pltpu

F32 = jnp.float32
BF16 = jnp.bfloat16
BN_EPS = 1e-5
VMEM_LIMIT = 32 * 1024 * 1024          # safe on v5e/v6e (128 MiB) and v7x (64 MiB)


def _round_up(x, m):
    return -(-x // m) * m


def _pick_tm(m, cap=512):
    """Row tile: the whole (small) M, else the largest mult-of-16 divisor <= cap."""
    if m <= cap:
        return m
    for t in range(cap, 15, -16):
        if m % t == 0:
            return t
    return None


def _pick_tn(n, cap=512):
    """Column tile: full N if small, else a multiple of 128 dividing N."""
    if n <= cap:
        return n, n
    for t in (512, 384, 256, 128):
        if n % t == 0:
            return t, n
    return 128, _round_up(n, 128)


# ----------------------------- fused matmul -----------------------------------

def _matmul_kernel(a_ref, b_ref, bias_ref, o_ref, *, activation):
    y = jnp.dot(a_ref[...], b_ref[...], preferred_element_type=jnp.float32)
    y = y + bias_ref[...]
    if activation == "relu":
        y = jnp.maximum(y, 0.0)
    elif activation == "tanh":
        y = jnp.tanh(y)
    o_ref[...] = y.astype(o_ref.dtype)


def matmul_bias_act(a, b, bias, activation="none", out_dtype=F32):
    """act(a @ b + bias); a:(M,K), b:(K,N), bias:(N,).  bf16 MXU, f32 accumulate."""
    M, K = a.shape
    _, N = b.shape
    a = a.astype(BF16)
    b = b.astype(BF16)
    bias = bias.astype(F32).reshape(1, N)

    Ma = _round_up(M, 8)
    tm = _pick_tm(Ma)
    if tm is None:
        tm = 512
    Mp = _round_up(Ma, tm)
    if Mp != M:
        a = jnp.pad(a, ((0, Mp - M), (0, 0)))

    tn, Np = _pick_tn(N)
    if Np != N:
        b = jnp.pad(b, ((0, 0), (0, Np - N)))
        bias = jnp.pad(bias, ((0, 0), (0, Np - N)))

    grid = (Np // tn, Mp // tm)          # N outer, M inner -> weight tile stays resident
    out = pl.pallas_call(
        functools.partial(_matmul_kernel, activation=activation),
        out_shape=jax.ShapeDtypeStruct((Mp, Np), out_dtype),
        grid_spec=pltpu.PrefetchScalarGridSpec(
            num_scalar_prefetch=0,
            grid=grid,
            in_specs=[pl.BlockSpec((tm, K), lambda j, i: (i, 0)),
                      pl.BlockSpec((K, tn), lambda j, i: (0, j)),
                      pl.BlockSpec((1, tn), lambda j, i: (0, j))],
            out_specs=pl.BlockSpec((tm, tn), lambda j, i: (i, j))),
        compiler_params=pltpu.CompilerParams(
            dimension_semantics=("parallel", "parallel"),
            vmem_limit_bytes=VMEM_LIMIT),
    )(a, b, bias)
    if Mp != M or Np != N:
        out = out[:M, :N]
    return out


# ----------------------------- batchnorm + relu --------------------------------

def _bn_stats_kernel(x_ref, s_ref, q_ref):
    @pl.when(pl.program_id(0) == 0)
    def _():
        s_ref[...] = jnp.zeros_like(s_ref)
        q_ref[...] = jnp.zeros_like(q_ref)
    x = x_ref[...].astype(jnp.float32)
    s_ref[...] += jnp.sum(x, axis=0, keepdims=True)
    q_ref[...] += jnp.sum(x * x, axis=0, keepdims=True)


def _bn_apply_kernel(x_ref, scale_ref, shift_ref, o_ref):
    y = x_ref[...].astype(jnp.float32) * scale_ref[...] + shift_ref[...]
    o_ref[...] = jnp.maximum(y, 0.0).astype(o_ref.dtype)


def batchnorm_relu(x_nhwc, gamma, beta, out_dtype=BF16):
    """Training-mode (batch statistics, biased var) BatchNorm2d + ReLU."""
    N, H, W, C = x_nhwc.shape
    M = N * H * W
    # fold spatial positions into lanes when C < 128 (lane-dense stores)
    fold = 1
    if C < 128 and 128 % C == 0 and M % (128 // C) == 0:
        fold = 128 // C
    C2, M2 = C * fold, M // fold
    x2 = x_nhwc.reshape(M2, C2)

    M2a = _round_up(M2, 8)
    tm = _pick_tm(M2a)
    if tm is None:
        tm = 512
    M2p = _round_up(M2a, tm)
    if M2p != M2:
        x2 = jnp.pad(x2, ((0, M2p - M2), (0, 0)))   # zero rows: harmless for the sums
    grid = (M2p // tm,)

    s, q = pl.pallas_call(
        _bn_stats_kernel,
        out_shape=(jax.ShapeDtypeStruct((1, C2), F32),
                   jax.ShapeDtypeStruct((1, C2), F32)),
        grid_spec=pltpu.PrefetchScalarGridSpec(
            num_scalar_prefetch=0,
            grid=grid,
            in_specs=[pl.BlockSpec((tm, C2), lambda i: (i, 0))],
            out_specs=(pl.BlockSpec((1, C2), lambda i: (0, 0)),
                       pl.BlockSpec((1, C2), lambda i: (0, 0)))),
        compiler_params=pltpu.CompilerParams(
            dimension_semantics=("arbitrary",),
            vmem_limit_bytes=VMEM_LIMIT),
    )(x2)

    s = s.reshape(fold, C).sum(axis=0)
    q = q.reshape(fold, C).sum(axis=0)
    mean = s / M
    var = jnp.maximum(q / M - mean * mean, 0.0)
    scale = gamma.astype(F32) * jax.lax.rsqrt(var + BN_EPS)
    shift = beta.astype(F32) - mean * scale
    scale2 = jnp.tile(scale, fold).reshape(1, C2)
    shift2 = jnp.tile(shift, fold).reshape(1, C2)

    out = pl.pallas_call(
        _bn_apply_kernel,
        out_shape=jax.ShapeDtypeStruct((M2p, C2), out_dtype),
        grid_spec=pltpu.PrefetchScalarGridSpec(
            num_scalar_prefetch=0,
            grid=grid,
            in_specs=[pl.BlockSpec((tm, C2), lambda i: (i, 0)),
                      pl.BlockSpec((1, C2), lambda i: (0, 0)),
                      pl.BlockSpec((1, C2), lambda i: (0, 0))],
            out_specs=pl.BlockSpec((tm, C2), lambda i: (i, 0))),
        compiler_params=pltpu.CompilerParams(
            dimension_semantics=("parallel",),
            vmem_limit_bytes=VMEM_LIMIT),
    )(x2, scale2, shift2)
    if M2p != M2:
        out = out[:M2]
    return out.reshape(N, H, W, C)


# ------------------------------- max pool 2x2 ----------------------------------

def _maxpool_kernel(x_ref, o_ref, *, c):
    x = x_ref[...]                                        # (1, TH, 2, OW, 2c)
    m = jnp.maximum(x[:, :, 0, :, :], x[:, :, 1, :, :])   # max over window rows
    o_ref[...] = jnp.maximum(m[..., :c], m[..., c:])      # max over window cols


def maxpool2x2(x_nhwc):
    N, H, W, C = x_nhwc.shape
    H2, W2 = H // 2, W // 2
    xr = x_nhwc.reshape(N, H2, 2, W2, 2 * C)   # free reshape: (2i+a, 2j+b, c) -> (i, a, j, b*C+c)
    th = H2
    for t in (28, 16, 14, 8, 7, 4, 2, 1):
        if H2 % t == 0:
            th = t
            break
    grid = (N, H2 // th)
    return pl.pallas_call(
        functools.partial(_maxpool_kernel, c=C),
        out_shape=jax.ShapeDtypeStruct((N, H2, W2, C), x_nhwc.dtype),
        grid_spec=pltpu.PrefetchScalarGridSpec(
            num_scalar_prefetch=0,
            grid=grid,
            in_specs=[pl.BlockSpec((1, th, 2, W2, 2 * C),
                                   lambda n, t: (n, t, 0, 0, 0))],
            out_specs=pl.BlockSpec((1, th, W2, C), lambda n, t: (n, t, 0, 0))),
        compiler_params=pltpu.CompilerParams(
            dimension_semantics=("parallel", "parallel"),
            vmem_limit_bytes=VMEM_LIMIT),
    )(xr)


# ------------------------------ conv wrappers ----------------------------------

def _conv_patches(x_nhwc, k, stride, pad):
    """im2col via strided slices + concat (no gather), in bf16."""
    x = x_nhwc.astype(BF16)
    if pad:
        x = jnp.pad(x, ((0, 0), (pad, pad), (pad, pad), (0, 0)))
    N, Hp, Wp, C = x.shape
    oh = (Hp - k) // stride + 1
    ow = (Wp - k) // stride + 1
    parts = []
    for kh in range(k):
        for kw in range(k):
            parts.append(jax.lax.slice(
                x, (0, kh, kw, 0),
                (N, kh + stride * (oh - 1) + 1, kw + stride * (ow - 1) + 1, C),
                (1, stride, stride, 1)))
    patches = jnp.concatenate(parts, axis=-1)               # (N, oh, ow, k*k*C)
    return patches.reshape(N * oh * ow, k * k * C), (N, oh, ow)


def conv2d(x_nhwc, w, b, stride, pad, activation="none", out_dtype=BF16):
    # w: (COUT, CIN, K, K) -- PyTorch Conv2d layout
    cout, cin, k, _ = w.shape
    patches, (N, oh, ow) = _conv_patches(x_nhwc, k, stride, pad)
    wmat = jnp.transpose(w, (2, 3, 1, 0)).reshape(k * k * cin, cout)
    out = matmul_bias_act(patches, wmat, b, activation, out_dtype)
    return out.reshape(N, oh, ow, cout)


def _deconv_weight_as_conv(w_t):
    """ConvTranspose2d(k=4,s=2,p=1) weights (CIN,COUT,4,4) -> equivalent
       Conv2d(k=3,s=1,p=1) weights (4*COUT,CIN,3,3); output channels ordered
       (row_parity r, col_parity c, cout) for a 2x pixel shuffle."""
    cin, cout = w_t.shape[0], w_t.shape[1]
    w = jnp.zeros((2, 2, cout, cin, 3, 3), w_t.dtype)
    for r in (0, 1):
        for u in (0, 1):
            du = r + u
            kh = (3 - 2 * u) if r == 0 else (2 - 2 * u)
            for c in (0, 1):
                for v in (0, 1):
                    dv = c + v
                    kw = (3 - 2 * v) if c == 0 else (2 - 2 * v)
                    w = w.at[r, c, :, :, du, dv].set(jnp.transpose(w_t[:, :, kh, kw]))
    return w.reshape(4 * cout, cin, 3, 3)


def conv_transpose2d_s2(x_nhwc, w_t, b, activation="none", out_dtype=F32):
    """ConvTranspose2d(cin,cout,4,stride=2,padding=1) == 3x3 conv (4*cout ch) + pixel shuffle."""
    cout = w_t.shape[1]
    w_conv = _deconv_weight_as_conv(w_t)
    y = conv2d(x_nhwc, w_conv, jnp.tile(b, 4), stride=1, pad=1,
               activation=activation, out_dtype=out_dtype)   # (N, H, W, 4*cout)
    N, H, W, _ = y.shape
    y = y.reshape(N, H, W, 2, 2, cout)
    y = jnp.transpose(y, (0, 1, 3, 2, 4, 5)).reshape(N, 2 * H, 2 * W, cout)
    return y


def conv_transpose_7x7_from_1x1(noise_nc, w_t, b, out_dtype=F32):
    """ConvTranspose2d(100,cout,7,1,0) on a 1x1 input is a single matmul."""
    cin, cout, k, _ = w_t.shape
    wmat = jnp.transpose(w_t, (0, 2, 3, 1)).reshape(cin, k * k * cout)
    out = matmul_bias_act(noise_nc, wmat, jnp.tile(b, k * k), "none", out_dtype)
    return out.reshape(noise_nc.shape[0], k, k, cout)


# --------------------------------- model ---------------------------------------

def init_params(key, d=128):
    ks = jax.random.split(key, 11)
    std = 0.02   # normal_init(mean=0, std=0.02); biases zero

    def w(k, shape):
        return jax.random.normal(k, shape, F32) * std

    p = {}
    p["deconv1_1_w"] = w(ks[0], (100, d * 2, 7, 7)); p["deconv1_1_b"] = jnp.zeros((d * 2,), F32)
    p["deconv2_w"] = w(ks[1], (d * 4, d * 2, 4, 4)); p["deconv2_b"] = jnp.zeros((d * 2,), F32)
    p["deconv3_w"] = w(ks[2], (d * 2, d * 2, 4, 4)); p["deconv3_b"] = jnp.zeros((d * 2,), F32)
    p["deconv4_w"] = w(ks[3], (d * 2, d, 4, 4));     p["deconv4_b"] = jnp.zeros((d,), F32)
    p["deconv5_w"] = w(ks[4], (d, d // 2, 4, 4));    p["deconv5_b"] = jnp.zeros((d // 2,), F32)
    p["deconv6_w"] = w(ks[5], (d // 2, 3, 4, 4));    p["deconv6_b"] = jnp.zeros((3,), F32)
    p["conv1_1_w"] = w(ks[6], (32, 3, 3, 3));        p["conv1_1_b"] = jnp.zeros((32,), F32)
    p["conv1_2_w"] = w(ks[7], (32, 32, 3, 3));       p["conv1_2_b"] = jnp.zeros((32,), F32)
    p["conv2_1_w"] = w(ks[8], (64, 32, 3, 3));       p["conv2_1_b"] = jnp.zeros((64,), F32)
    p["conv2_2_w"] = w(ks[9], (64, 64, 3, 3));       p["conv2_2_b"] = jnp.zeros((64,), F32)
    p["conv3_1_w"] = w(ks[10], (256, 64, 3, 3));     p["conv3_1_b"] = jnp.zeros((256,), F32)
    for name, c in [("bn1", d * 2), ("bn2", d * 2), ("bn3", d * 2), ("bn4", d), ("bn5", d // 2)]:
        p[name + "_g"] = jnp.ones((c,), F32)   # BatchNorm2d defaults
        p[name + "_b"] = jnp.zeros((c,), F32)
    return p


def generator_224_forward(p, noise_nchw, label_nchw):
    B = noise_nchw.shape[0]
    noise = noise_nchw.reshape(B, 100)
    lab = jnp.transpose(label_nchw, (0, 2, 3, 1))                    # NCHW -> NHWC

    # noise branch
    x = conv_transpose_7x7_from_1x1(noise, p["deconv1_1_w"], p["deconv1_1_b"])
    x = batchnorm_relu(x, p["bn1_g"], p["bn1_b"])                    # (B,7,7,256)

    # label branch
    l = conv2d(lab, p["conv1_1_w"], p["conv1_1_b"], 1, 1, "relu")    # (B,224,224,32)
    l = conv2d(l, p["conv1_2_w"], p["conv1_2_b"], 1, 1, "relu")
    l = maxpool2x2(l)                                                # (B,112,112,32)
    l = conv2d(l, p["conv2_1_w"], p["conv2_1_b"], 2, 1, "relu")      # (B,56,56,64)
    l = conv2d(l, p["conv2_2_w"], p["conv2_2_b"], 2, 1, "relu")      # (B,28,28,64)
    l = maxpool2x2(l)                                                # (B,14,14,64)
    y = conv2d(l, p["conv3_1_w"], p["conv3_1_b"], 2, 1, "relu")      # (B,7,7,256)

    x = jnp.concatenate([x, y.astype(x.dtype)], axis=-1)             # (B,7,7,512)
    x = batchnorm_relu(conv_transpose2d_s2(x, p["deconv2_w"], p["deconv2_b"]),
                       p["bn2_g"], p["bn2_b"])                       # (B,14,14,256)
    x = batchnorm_relu(conv_transpose2d_s2(x, p["deconv3_w"], p["deconv3_b"]),
                       p["bn3_g"], p["bn3_b"])                       # (B,28,28,256)
    x = batchnorm_relu(conv_transpose2d_s2(x, p["deconv4_w"], p["deconv4_b"]),
                       p["bn4_g"], p["bn4_b"])                       # (B,56,56,128)
    x = batchnorm_relu(conv_transpose2d_s2(x, p["deconv5_w"], p["deconv5_b"]),
                       p["bn5_g"], p["bn5_b"])                       # (B,112,112,64)
    x = conv_transpose2d_s2(x, p["deconv6_w"], p["deconv6_b"],
                            activation="tanh", out_dtype=F32)        # (B,224,224,3)
    return jnp.transpose(x, (0, 3, 1, 2))                            # back to NCHW


if __name__ == "__main__":
    key = jax.random.PRNGKey(0)
    kp, kn, kl = jax.random.split(key, 3)
    params = init_params(kp, d=128)

    B = 2
    noise = jax.random.normal(kn, (B, 100, 1, 1), F32)     # "input"
    label = jax.random.normal(kl, (B, 3, 224, 224), F32)   # "label" (224 pinned: 224/32 == 7)

    out = generator_224_forward(params, noise, label)
    out = jax.block_until_ready(out)
    assert out.shape == (B, 3, 224, 224), out.shape
    assert bool(jnp.all(jnp.isfinite(out)))
    print("KERNEL_OK")
</pallas_src>

<mosaic_0001>
module attributes {stable_mosaic.version = 11 : i64} {
  func.func @_matmul_kernel(%arg0: i32, %arg1: i32, %arg2: memref<8x100xbf16, #tpu.memory_space<vmem>>, %arg3: memref<100x256xbf16, #tpu.memory_space<vmem>>, %arg4: memref<1x256xf32, #tpu.memory_space<vmem>>, %arg5: memref<8x256xf32, #tpu.memory_space<vmem>>) attributes {dimension_semantics = [#tpu.dimension_semantics<parallel>, #tpu.dimension_semantics<parallel>], iteration_bounds = array<i64: 49, 1>, scalar_prefetch = 0 : i64, scratch_operands = 0 : i64, tpu.core_type = #tpu.core_type<tc>, window_params = [{transform_indices = @transform_0, window_bounds = array<i64: 8, 100>}, {transform_indices = @transform_1, window_bounds = array<i64: 100, 256>}, {transform_indices = @transform_2, window_bounds = array<i64: 1, 256>}, {transform_indices = @transform_3, window_bounds = array<i64: 8, 256>}]} {
    %c0 = arith.constant 0 : index
    %c0_0 = arith.constant 0 : index
    %0 = vector.load %arg2[%c0, %c0_0] : memref<8x100xbf16, #tpu.memory_space<vmem>>, vector<8x100xbf16>
    %c0_1 = arith.constant 0 : index
    %c0_2 = arith.constant 0 : index
    %1 = vector.load %arg3[%c0_1, %c0_2] : memref<100x256xbf16, #tpu.memory_space<vmem>>, vector<100x256xbf16>
    %cst = arith.constant dense<0.000000e+00> : vector<8x256xf32>
    %2 = tpu.matmul %0, %1, %cst {dimension_numbers = #tpu.dot_dimension_numbers<[1], [0], [0], [1], [0, 0, 1, 1], [], []>} : vector<8x100xbf16>, vector<100x256xbf16>, vector<8x256xf32> -> vector<8x256xf32>
    %c0_3 = arith.constant 0 : index
    %c0_4 = arith.constant 0 : index
    %3 = vector.load %arg4[%c0_3, %c0_4] : memref<1x256xf32, #tpu.memory_space<vmem>>, vector<1x256xf32>
    %4 = vector.broadcast %3 : vector<1x256xf32> to vector<8x256xf32>
    %5 = arith.addf %2, %4 : vector<8x256xf32>
    %c0_5 = arith.constant 0 : index
    %c0_6 = arith.constant 0 : index
    %6 = vector.load %arg5[%c0_5, %c0_6] : memref<8x256xf32, #tpu.memory_space<vmem>>, vector<8x256xf32>
    tpu.vector_store %arg5[%c0_5, %c0_6], %5 {strides = array<i32>} : memref<8x256xf32, #tpu.memory_space<vmem>>, vector<8x256xf32>,
    return
  }
  func.func @transform_0(%arg0: i32, %arg1: i32) -> (i32, i32) {
    %c0_i32 = arith.constant 0 : i32
    %c0_i32_0 = arith.constant 0 : i32
    return %arg1, %c0_i32 : i32, i32
  }
  func.func @transform_1(%arg0: i32, %arg1: i32) -> (i32, i32) {
    %c0_i32 = arith.constant 0 : i32
    %c0_i32_0 = arith.constant 0 : i32
    return %c0_i32, %arg0 : i32, i32
  }
  func.func @transform_2(%arg0: i32, %arg1: i32) -> (i32, i32) {
    %c0_i32 = arith.constant 0 : i32
    %c0_i32_0 = arith.constant 0 : i32
    return %c0_i32, %arg0 : i32, i32
  }
  func.func @transform_3(%arg0: i32, %arg1: i32) -> (i32, i32) {
    %c0_i32 = arith.constant 0 : i32
    return %arg1, %arg0 : i32, i32
  }
}

</mosaic_0001>

<llo_original>
// kernel: tpu_custom_call.1
$region0: #{tpu_custom_call.1}
  #allocation0 [shape = 'u32[]', space=smem, size = 0x4, offset = 0x4, fixed_abs, tag = 'smem constant byte address 0x4 - core index']
  #allocation1 [shape = 'u32[72,128]{1,0:T(1,128)}', space=vmem, size = 0x9000, scoped, tag = 'internal scratch']
  %s0 = inlined_call_operand.hbm [shape: bf16[8,100], index: 0, kind: input, shape index: {}]
  %s1 = inlined_call_operand.hbm [shape: bf16[100,12544], index: 1, kind: input, shape index: {}]
  %s2 = inlined_call_operand.hbm [shape: f32[1,12544], index: 2, kind: input, shape index: {}]
  %s3 = inlined_call_operand.hbm [shape: f32[8,12544], index: 3, kind: output, shape index: {}]
  %s4 = sld [smem:[#allocation0]]
  $region57: #{tpu_custom_call.1} parent=0
    _
  %s6 = ssub.s32 1, %s4
  %s7 = scalar_select 0, %s6, %s4
  $region1: #{tpu_custom_call.1} parent=0
    #allocation2 [shape = 'u8[2048]{0}', space=vmem, size = 0x800, scoped, tag = 'input window, operand 0, single buffered']
    #allocation3 [shape = 's32[2]{0}', space=sflag, size = 0x8, scoped, tag = 'scoped memory for tpu_custom_call.1']
    #allocation4 [shape = 's32[2]{0}', space=sflag, size = 0x8, scoped, tag = 'scoped memory for tpu_custom_call.1']
    #allocation5 [shape = 'u8[106496]{0}', space=vmem, size = 0x1a000, scoped, tag = 'input window, operand 1']
    #allocation6 [shape = 's32[2]{0}', space=sflag, size = 0x8, scoped, tag = 'scoped memory for tpu_custom_call.1']
    #allocation7 [shape = 'u8[2048]{0}', space=vmem, size = 0x800, scoped, tag = 'input window, operand 2']
    #allocation8 [shape = 'u8[16384]{0}', space=vmem, size = 0x4000, scoped, tag = 'output window, operand 0']
    %8 = vsyncpa [#allocation3], 0
    %9 = vsyncpa [#allocation6], 0
    %s10 = scalar_lea.sflag [#allocation6], 1
    %11 = vsyncpa %s10, 0
    %12 = vsyncpa [#allocation4], 0
    %s13 = scalar_lea.sflag [#allocation4], 1
    %14 = vsyncpa %s13, 0
    loop: start=0, step=1, limit=51
    $region2: #{tpu_custom_call.1} parent=1 // loop_pre_header
      _
    $region3: #{tpu_custom_call.1} parent=1 // loop_header
      %s16 = sphi 0, %s20
      %p17 = scmp.ge.s32.totalorder %s16, 51
      %s23 = sphi 0, %s35
      %s24 = sphi 0, %s31
      %s25 = sphi 0, %s23
      %s26 = sphi 0, %s24
      %s27 = sphi 0, %s25
      %s28 = sphi 0, %s26
      %s38 = sphi 0, %s40
      %s41 = sphi 0, %s38
      %s42 = sphi 0, %s41
      %s58 = sphi 0, %s42
      %s64 = sphi 0, %s66
      %s67 = sphi 0, %s64
      %s68 = sphi 0, %s67
      %s84 = sphi 0, %s68
      %s90 = sphi 0, %s92
      %s93 = sphi 0, %s90
      %s94 = sphi 0, %s93
      %s110 = sphi 0, %s94
      %s118 = sphi 0, %s120
      %s121 = sphi 0, %s118
      %s122 = sphi 0, %s121
      %s138 = sphi 0, %s122
    $region4: #{tpu_custom_call.1} parent=1 // loop_header_branch
      %19 = sbr.rel (%p17) target = $region8
    $region5: #{tpu_custom_call.1} parent=1 // loop_body
      %s21 = ssub.s32 %s16, 1
      %s22 = ssub.s32 %s16, 2
      %s29 = sadd.s32 1, %s24
      %p30 = scmp.ge.s32.totalorder %s29, 1
      %s31 = scalar_select %p30, 0, %s29
      %s32 = sadd.s32 1, %s23
      %s33 = scalar_select %p30, %s32, %s23
      %p34 = scmp.ge.s32.totalorder %s33, 49
      %s35 = scalar_select %p34, 0, %s33
      %s36 = ssub.s32 %s24, %s31
      %p37 = scmp.eq.s32.totalorder %s36, 0
      %s39 = sadd.s32 %s38, 1
      %s40 = scalar_select %p37, %s38, %s39
      %p43 = pneg %p37
      %p44 = scmp.eq.s32.totalorder %s16, 48
      %p45 = por %p43, %p44
      %p46 = scmp.ne.s32.totalorder %s38, %s41
      %p47 = scmp.eq.s32.totalorder %s16, 0
      %p48 = por %p46, %p47
      %p49 = scmp.ne.s32.totalorder %s38, %s41
      %p50 = scmp.eq.s32.totalorder %s21, 48
      %p51 = por %p49, %p50
      %p52 = scmp.ne.s32.totalorder %s41, %s42
      %p53 = scmp.eq.s32.totalorder %s21, 0
      %p54 = por %p52, %p53
      %p55 = scmp.ne.s32.totalorder %s41, %s42
      %p56 = scmp.eq.s32.totalorder %s22, 48
      %p57 = por %p55, %p56
      %p59 = scmp.ne.s32.totalorder %s42, %s58
      %p60 = scmp.eq.s32.totalorder %s22, 0
      %p61 = por %p59, %p60
      %s62 = ssub.s32 %s23, %s35
      %p63 = scmp.eq.s32.totalorder %s62, 0
      %s65 = sadd.s32 %s64, 1
      %s66 = scalar_select %p63, %s64, %s65
      %p69 = pneg %p63
      %p70 = scmp.eq.s32.totalorder %s16, 48
      %p71 = por %p69, %p70
      %p72 = scmp.ne.s32.totalorder %s64, %s67
      %p73 = scmp.eq.s32.totalorder %s16, 0
      %p74 = por %p72, %p73
      %p75 = scmp.ne.s32.totalorder %s64, %s67
      %p76 = scmp.eq.s32.totalorder %s21, 48
      %p77 = por %p75, %p76
      %p78 = scmp.ne.s32.totalorder %s67, %s68
      %p79 = scmp.eq.s32.totalorder %s21, 0
      %p80 = por %p78, %p79
      %p81 = scmp.ne.s32.totalorder %s67, %s68
      %p82 = scmp.eq.s32.totalorder %s22, 48
      %p83 = por %p81, %p82
      %p85 = scmp.ne.s32.totalorder %s68, %s84
      %p86 = scmp.eq.s32.totalorder %s22, 0
      %p87 = por %p85, %p86
      %s88 = ssub.s32 %s23, %s35
      %p89 = scmp.eq.s32.totalorder %s88, 0
      %s91 = sadd.s32 %s90, 1
      %s92 = scalar_select %p89, %s90, %s91
      %p95 = pneg %p89
      %p96 = scmp.eq.s32.totalorder %s16, 48
      %p97 = por %p95, %p96
      %p98 = scmp.ne.s32.totalorder %s90, %s93
      %p99 = scmp.eq.s32.totalorder %s16, 0
      %p100 = por %p98, %p99
      %p101 = scmp.ne.s32.totalorder %s90, %s93
      %p102 = scmp.eq.s32.totalorder %s21, 48
      %p103 = por %p101, %p102
      %p104 = scmp.ne.s32.totalorder %s93, %s94
      %p105 = scmp.eq.s32.totalorder %s21, 0
      %p106 = por %p104, %p105
      %p107 = scmp.ne.s32.totalorder %s93, %s94
      %p108 = scmp.eq.s32.totalorder %s22, 48
      %p109 = por %p107, %p108
      %p111 = scmp.ne.s32.totalorder %s94, %s110
      %p112 = scmp.eq.s32.totalorder %s22, 0
      %p113 = por %p111, %p112
      %s114 = ssub.s32 %s24, %s31
      %s115 = ssub.s32 %s23, %s35
      %s116 = sor.u32 %s114, %s115
      %p117 = scmp.eq.s32.totalorder %s116, 0
      %s119 = sadd.s32 %s118, 1
      %s120 = scalar_select %p117, %s118, %s119
      %p123 = pneg %p117
      %p124 = scmp.eq.s32.totalorder %s16, 48
      %p125 = por %p123, %p124
      %p126 = scmp.ne.s32.totalorder %s118, %s121
      %p127 = scmp.eq.s32.totalorder %s16, 0
      %p128 = por %p126, %p127
      %p129 = scmp.ne.s32.totalorder %s118, %s121
      %p130 = scmp.eq.s32.totalorder %s21, 48
      %p131 = por %p129, %p130
      %p132 = scmp.ne.s32.totalorder %s121, %s122
      %p133 = scmp.eq.s32.totalorder %s21, 0
      %p134 = por %p132, %p133
      %p135 = scmp.ne.s32.totalorder %s121, %s122
      %p136 = scmp.eq.s32.totalorder %s22, 48
      %p137 = por %p135, %p136
      %p139 = scmp.ne.s32.totalorder %s122, %s138
      %p140 = scmp.eq.s32.totalorder %s22, 0
      %p141 = por %p139, %p140
      %p142 = scmp.le.s32.totalorder 1, %s16
      %p143 = scmp.lt.s32.totalorder %s16, 50
      %p144 = pnand %p142, %p143
      %p145 = pneg %p144
      // Predicated region
      $region9: #{tpu_custom_call.1} parent=5 // pred_check
        _
      $region10: #{tpu_custom_call.1} parent=5 // pred_check_branch
        %147 = sbr.rel (%p144) target = $region12
      $region11: #{tpu_custom_call.1} parent=5 // pred_region
        %s148 = ssub.s32 %s16, 1
        // Predicated region
        $region13: #{tpu_custom_call.1} parent=11 // pred_check
          %p149 = pneg %p54
        $region14: #{tpu_custom_call.1} parent=11 // pred_check_branch
          %151 = sbr.rel (%p149) target = $region16
        $region15: #{tpu_custom_call.1} parent=11 // pred_region
          %153 = vsyncadd [#allocation3], 0
          %s154 = smul.addr %s26, 4
          %s155 = scalar_lea.hbm %s0, %s154
          %s157 = sshll.u32 %s155, 4
          %s158 = int_to_ptr.hbm [resolvable:$true] %s157
          %s159 = sshll.u32 [#allocation2], 4
          %s160 = int_to_ptr.vmem [resolvable:$true] %s159
          %162 = dma.hbm_to_vmem [thread:$0]  %s158, 64, %s160, [#allocation3]
        $region16: #{tpu_custom_call.1} parent=11 // pred_fallthru
          _
      $region12: #{tpu_custom_call.1} parent=5 // pred_fallthru
        _
      %p163 = scmp.lt.s32.totalorder %s16, 49
      // Predicated region
      $region17: #{tpu_custom_call.1} parent=5 // pred_check
        %p164 = pneg %p163
      $region18: #{tpu_custom_call.1} parent=5 // pred_check_branch
        %166 = sbr.rel (%p164) target = $region20
      $region19: #{tpu_custom_call.1} parent=5 // pred_region
        // Predicated region
        $region21: #{tpu_custom_call.1} parent=19 // pred_check
          %p167 = pneg %p74
        $region22: #{tpu_custom_call.1} parent=19 // pred_check_branch
          %169 = sbr.rel (%p167) target = $region24
        $region23: #{tpu_custom_call.1} parent=19 // pred_region
          %s170 = sand.u32 %s16, 1
          %s171 = scalar_lea.sflag [#allocation6], %s170
          %s172 = sand.u32 %s64, 1
          %s173 = smul.addr %s172, 104
          %s174 = scalar_lea.vmem [#allocation5], %s173
          %s175 = smul.u32 2, %s23
          %177 = vsyncadd %s171, 0
          %s178 = smul.addr %s175, 4
          %s179 = scalar_lea.hbm %s1, %s178
          %s180 = sshll.u32 %s179, 4
          %s181 = int_to_ptr.hbm [resolvable:$true] %s180
          %s182 = sshll.u32 %s174, 4
          %s183 = int_to_ptr.vmem [resolvable:$true] %s182
          %188 = dma.hbm_to_vmem [thread:$0]  %s181, 1664, %s183, %s171, 6272, 128, 8
        $region24: #{tpu_custom_call.1} parent=19 // pred_fallthru
          _
        // Predicated region
        $region25: #{tpu_custom_call.1} parent=19 // pred_check
          %p189 = pneg %p100
        $region26: #{tpu_custom_call.1} parent=19 // pred_check_branch
          %191 = sbr.rel (%p189) target = $region28
        $region27: #{tpu_custom_call.1} parent=19 // pred_region
          %s192 = sand.u32 %s16, 1
          %s193 = scalar_lea.sflag [#allocation6], %s192
          %s194 = sand.u32 %s90, 1
          %s195 = smul.addr %s194, 2
          %s196 = scalar_lea.vmem [#allocation7], %s195
          %s197 = smul.u32 2, %s23
          %199 = vsyncadd %s193, 0
          %s200 = scalar_lea.hbm %s2, %s197
          %s202 = sshll.u32 %s200, 4
          %s203 = int_to_ptr.hbm [resolvable:$true] %s202
          %s204 = sshll.u32 %s196, 4
          %s205 = int_to_ptr.vmem [resolvable:$true] %s204
          %207 = dma.hbm_to_vmem [thread:$0]  %s203, 32, %s205, %s193
        $region28: #{tpu_custom_call.1} parent=19 // pred_fallthru
          _
      $region20: #{tpu_custom_call.1} parent=5 // pred_fallthru
        _
      %p208 = scmp.le.s32.totalorder 1, %s16
      %p209 = scmp.lt.s32.totalorder %s16, 50
      %p210 = pnand %p208, %p209
      %p211 = pneg %p210
      // Predicated region
      $region29: #{tpu_custom_call.1} parent=5 // pred_check
        _
      $region30: #{tpu_custom_call.1} parent=5 // pred_check_branch
        %213 = sbr.rel (%p210) target = $region32
      $region31: #{tpu_custom_call.1} parent=5 // pred_region
        %s214 = ssub.s32 %s16, 1
        // Predicated region
        $region33: #{tpu_custom_call.1} parent=31 // pred_check
          %p215 = pneg %p54
        $region34: #{tpu_custom_call.1} parent=31 // pred_check_branch
          %217 = sbr.rel (%p215) target = $region36
        $region35: #{tpu_custom_call.1} parent=31 // pred_region
          %219 = dma.done [#allocation3], 64
        $region36: #{tpu_custom_call.1} parent=31 // pred_fallthru
          _
        %s220 = sand.u32 %s21, 1
        %s221 = scalar_lea.sflag [#allocation6], %s220
        %s222 = sand.u32 %s67, 1
        %s223 = smul.addr %s222, 104
        %s224 = scalar_lea.vmem [#allocation5], %s223
        // Predicated region
        $region37: #{tpu_custom_call.1} parent=31 // pred_check
          %p225 = pneg %p80
        $region38: #{tpu_custom_call.1} parent=31 // pred_check_branch
          %227 = sbr.rel (%p225) target = $region40
        $region39: #{tpu_custom_call.1} parent=31 // pred_region
          %229 = dma.done %s221, 1664
        $region40: #{tpu_custom_call.1} parent=31 // pred_fallthru
          _
        %s230 = sand.u32 %s21, 1
        %s231 = scalar_lea.sflag [#allocation6], %s230
        %s232 = sand.u32 %s93, 1
        %s233 = smul.addr %s232, 2
        %s234 = scalar_lea.vmem [#allocation7], %s233
        // Predicated region
        $region41: #{tpu_custom_call.1} parent=31 // pred_check
          %p235 = pneg %p106
        $region42: #{tpu_custom_call.1} parent=31 // pred_check_branch
          %237 = sbr.rel (%p235) target = $region44
        $region43: #{tpu_custom_call.1} parent=31 // pred_region
          %239 = dma.done %s231, 32
        $region44: #{tpu_custom_call.1} parent=31 // pred_fallthru
          _
        %p240 = pneg %p54
        %p241 = pneg %p51
        %s242 = sand.u32 %s21, 1
        %s243 = scalar_lea.sflag [#allocation6], %s242
        %s244 = sand.u32 %s67, 1
        %s245 = smul.addr %s244, 104
        %s246 = scalar_lea.vmem [#allocation5], %s245
        %p247 = pneg %p80
        %p248 = pneg %p77
        %s249 = sand.u32 %s21, 1
        %s250 = scalar_lea.sflag [#allocation6], %s249
        %s251 = sand.u32 %s93, 1
        %s252 = smul.addr %s251, 2
        %s253 = scalar_lea.vmem [#allocation7], %s252
        %p254 = pneg %p106
        %p255 = pneg %p103
        %p256 = pneg %p134
        %p257 = pneg %p131
        %s258 = sand.u32 %s121, 1
        %s259 = scalar_lea.sflag [#allocation4], %s258
        %s260 = sand.u32 %s121, 1
        %s261 = smul.addr %s260, 16
        %s262 = scalar_lea.vmem [#allocation8], %s261
        %s263 = smul.u32 2, %s25
        %s264 = smul.u32 2, %s25
        %s265 = smul.u32 2, %s25
        %v267 = vld [vmem:[#allocation2] sm:$0xf]
        %v268 = vld [vmem:[%s224] sm:$0xff]
        %v269 = vld [vmem:[%s224 + $0x8] sm:$0xff]
        %v270 = vld [vmem:[%s224 + $0x10] sm:$0xff]
        %v271 = vld [vmem:[%s224 + $0x18] sm:$0xff]
        %v272 = vld [vmem:[%s224 + $0x20] sm:$0xff]
        %v273 = vld [vmem:[%s224 + $0x28] sm:$0xff]
        %v274 = vld [vmem:[%s224 + $0x30] sm:$0xff]
        %v275 = vld [vmem:[%s224 + $0x38] sm:$0xff]
        %v276 = vld [vmem:[%s224 + $0x40] sm:$0xff]
        %v277 = vld [vmem:[%s224 + $0x48] sm:$0xff]
        %v278 = vld [vmem:[%s224 + $0x50] sm:$0xff]
        %v279 = vld [vmem:[%s224 + $0x58] sm:$0xff]
        %v280 = vld [vmem:[%s224 + $0x60] sm:$0x33]
        %v281 = vld [vmem:[%s234] sm:$0x3]
        %v283 = vperm.slane %v281, 0
        %v284 = vperm.slane %v281, 1
        %v300 = vunpack.c.l.b16 %v268
        %v301 = vunpack.c.h.b16 %v268
        %v302 = vunpack.c.l.b16 %v269
        %v303 = vunpack.c.h.b16 %v269
        %v304 = vunpack.c.l.b16 %v270
        %v305 = vunpack.c.h.b16 %v270
        %v306 = vunpack.c.l.b16 %v271
        %v307 = vunpack.c.h.b16 %v271
        %v308 = vunpack.c.l.b16 %v272
        %v309 = vunpack.c.h.b16 %v272
        %v310 = vunpack.c.l.b16 %v273
        %v311 = vunpack.c.h.b16 %v273
        %v312 = vunpack.c.l.b16 %v274
        %v313 = vunpack.c.h.b16 %v274
        %v314 = vunpack.c.l.b16 %v275
        %v315 = vunpack.c.h.b16 %v275
        %v316 = vunpack.c.l.b16 %v276
        %v317 = vunpack.c.h.b16 %v276
        %v318 = vunpack.c.l.b16 %v277
        %v319 = vunpack.c.h.b16 %v277
        %v320 = vunpack.c.l.b16 %v278
        %v321 = vunpack.c.h.b16 %v278
        %v322 = vunpack.c.l.b16 %v279
        %v323 = vunpack.c.h.b16 %v279
        %v324 = vunpack.c.l.b16 %v280
        %v325 = vunpack.c.h.b16 %v280
        %v326 = vpack.c.b16 %v302, %v300
        %v327 = vpack.c.b16 %v303, %v301
        %v328 = vpack.c.b16 %v306, %v304
        %v329 = vpack.c.b16 %v307, %v305
        %v330 = vpack.c.b16 %v310, %v308
        %v331 = vpack.c.b16 %v311, %v309
        %v332 = vpack.c.b16 %v314, %v312
        %v333 = vpack.c.b16 %v315, %v313
        %v334 = vpack.c.b16 %v318, %v316
        %v335 = vpack.c.b16 %v319, %v317
        %v336 = vpack.c.b16 %v322, %v320
        %v337 = vpack.c.b16 %v323, %v321
        %v338 = vpack.c.b16 %v324, %v324
        %v339 = vpack.c.b16 %v325, %v325
        %vm352 = vcmask 818176
        %v354 = vsel %vm352, %v267, 0
        %vm356 = vcmask 1041408
        %v358 = vsel %vm356, %v338, 0
        %v361 = vsel %vm356, %v339, 0
        %363 = vmatpush.bf16.msra.mxu0 0
        %364 = vmatpush.bf16.msra.mxu0 %v358
        %365 = vmatpush.bf16.msra.mxu0 %v336
        %366 = vmatpush.bf16.msra.mxu0 %v334
        %367 = vmatpush.bf16.msra.mxu0 %v332
        %368 = vmatpush.bf16.msra.mxu0 %v330
        %369 = vmatpush.bf16.msra.mxu0 %v328
        %370 = vmatpush.bf16.msra.mxu0 %v326
        %371 = vmatmul.bf16.gmra.mxu0 %v354
        %v372 = vpop.f32.mrf.mxu0
        %v373 = vadd.f32 %v283, %v372
        %v374 = vpop.f32.mrf.mxu0
        %375 = vdwg.mxu0
        %376 = vmatpush.bf16.msra.mxu0 0
        %377 = vmatpush.bf16.msra.mxu0 %v361
        %378 = vmatpush.bf16.msra.mxu0 %v337
        %379 = vmatpush.bf16.msra.mxu0 %v335
        %380 = vmatpush.bf16.msra.mxu0 %v333
        %381 = vmatpush.bf16.msra.mxu0 %v331
        %382 = vmatpush.bf16.msra.mxu0 %v329
        %383 = vmatpush.bf16.msra.mxu0 %v327
        %384 = vmatmul.bf16.gmra.mxu0 %v354
        %v385 = vpop.f32.mrf.mxu0
        %v386 = vadd.f32 %v284, %v385
        %v387 = vpop.f32.mrf.mxu0
        %388 = vdwg.mxu0
        %389 = vst [vmem:[%s262] sm:$0xff] %v373
        %390 = vst [vmem:[%s262 + $0x8] sm:$0xff] %v386
        %s391 = sand.u32 %s121, 1
        %s392 = scalar_lea.sflag [#allocation4], %s391
        %s393 = sand.u32 %s121, 1
        %s394 = smul.addr %s393, 16
        %s395 = scalar_lea.vmem [#allocation8], %s394
        // Predicated region
        $region45: #{tpu_custom_call.1} parent=31 // pred_check
          %p396 = pneg %p131
        $region46: #{tpu_custom_call.1} parent=31 // pred_check_branch
          %398 = sbr.rel (%p396) target = $region48
        $region47: #{tpu_custom_call.1} parent=31 // pred_region
          %s399 = smul.u32 2, %s25
          %401 = vsyncadd %s392, 0
          %s402 = smul.addr %s26, 98
          %s403 = sadd.s32 %s399, %s402
          %s404 = smul.addr %s403, 8
          %s405 = scalar_lea.hbm %s3, %s404
          %s407 = sshll.u32 %s395, 4
          %s408 = int_to_ptr.vmem [resolvable:$true] %s407
          %s409 = sshll.u32 %s405, 4
          %s410 = int_to_ptr.hbm [resolvable:$true] %s409
          %412 = dma.vmem_to_hbm [thread:$0]  %s408, 256, %s410, %s392
        $region48: #{tpu_custom_call.1} parent=31 // pred_fallthru
          _
      $region32: #{tpu_custom_call.1} parent=5 // pred_fallthru
        _
      %p413 = scmp.le.s32.totalorder 2, %s16
      // Predicated region
      $region49: #{tpu_custom_call.1} parent=5 // pred_check
        %p414 = pneg %p413
      $region50: #{tpu_custom_call.1} parent=5 // pred_check_branch
        %416 = sbr.rel (%p414) target = $region52
      $region51: #{tpu_custom_call.1} parent=5 // pred_region
        %s417 = ssub.s32 %s16, 2
        // Predicated region
        $region53: #{tpu_custom_call.1} parent=51 // pred_check
          %p418 = pneg %p137
        $region54: #{tpu_custom_call.1} parent=51 // pred_check_branch
          %420 = sbr.rel (%p418) target = $region56
        $region55: #{tpu_custom_call.1} parent=51 // pred_region
          %s421 = sand.u32 %s122, 1
          %s422 = scalar_lea.sflag [#allocation4], %s421
          %s423 = sand.u32 %s122, 1
          %s424 = smul.addr %s423, 16
          %s425 = scalar_lea.vmem [#allocation8], %s424
          %427 = dma.done %s422, 256
        $region56: #{tpu_custom_call.1} parent=51 // pred_fallthru
          _
      $region52: #{tpu_custom_call.1} parent=5 // pred_fallthru
        _
    $region6: #{tpu_custom_call.1} parent=1 // loop_footer
      %s20 = sadd.s32 1, %s16
    $region7: #{tpu_custom_call.1} parent=1 // loop_footer_branch
      %15 = sbr.rel target = $region3
    $region8: #{tpu_custom_call.1} parent=1 // loop_exit
      _
    %428 = vsyncpa [#allocation3], 1
    %s429 = scalar_lea.sflag [#allocation3], 1
    %430 = vsyncpa %s429, 1
    %431 = vsyncpa [#allocation6], 1
    %s432 = scalar_lea.sflag [#allocation6], 1
    %433 = vsyncpa %s432, 1
    %434 = vsyncpa [#allocation4], 1
    %s435 = scalar_lea.sflag [#allocation4], 1
    %436 = vsyncpa %s435, 1

</llo_original>
